<compile_context>
chip_gen: v6e
topology: v6e:2x2x1
jax: 0.10.0
libtpu: 0.0.40
codegen_flags: <defaults>
</compile_context>

<pallas_src>
import jax
import jax.numpy as jnp
import numpy as np
from jax import lax
from jax.experimental import pallas as pl
from jax.experimental.pallas import tpu as pltpu

KERNEL_SIZE = 7
PAD = (KERNEL_SIZE - 1) // 2


def _conv_toeplitz(conv_weight, H, W, channel_scale=(1.0, 1.0)):
    """Fold a (1, 2, K, K) 'same' cross-correlation into a single fused matrix
    T of shape (2*H*W, H*W) such that
        out[n, p] = concat([in[n, 0, :], in[n, 1, :]], -1) @ T
    with flattened (h, w) pixel indices and zero padding baked into T.
    channel_scale[c] is multiplied into channel c's rows (used to fold 1/C)."""
    K = conv_weight.shape[-1]
    pad = (K - 1) // 2
    w = conv_weight[0].astype(jnp.float32)                      # (2, K, K)
    hi = jnp.arange(H)
    wi = jnp.arange(W)
    dh = hi[:, None] - hi[None, :] + pad                        # (H_in, H_out)
    dw = wi[:, None] - wi[None, :] + pad                        # (W_in, W_out)
    valid = (((dh >= 0) & (dh < K))[:, None, :, None]
             & ((dw >= 0) & (dw < K))[None, :, None, :])        # (H, W, H, W)
    dh_c = jnp.clip(dh, 0, K - 1)
    dw_c = jnp.clip(dw, 0, K - 1)
    t = w[:, dh_c[:, None, :, None], dw_c[None, :, None, :]]    # (2, H, W, H, W)
    t = jnp.where(valid[None], t, 0.0)
    t = t * jnp.asarray(channel_scale, jnp.float32)[:, None, None, None, None]
    return t.reshape(2 * H * W, H * W)


def _spatial_attention_kernel(x_ref, t_ref, o_ref, sum_ref, max_ref):
    # x_ref  : (nb, tc, HW)   channel chunk of the input (lane-dense HW last)
    # t_ref  : (2*HW, HW)     fused Toeplitz conv matrix (bf16, 1/C folded in)
    # o_ref  : (nb, HW)       attention map, written on the last channel step
    # sum_ref/max_ref : (nb, HW) f32 running channel sum / channel max
    c_idx = pl.program_id(1)

    x = x_ref[...]
    # Sum accumulates in f32; max stays in the input dtype and only the result
    # is widened (avoids materializing a full f32 copy of the chunk).
    part_sum = jnp.sum(x, axis=1, dtype=jnp.float32)      # (nb, HW)
    part_max = jnp.max(x, axis=1).astype(jnp.float32)     # (nb, HW)

    @pl.when(c_idx == 0)
    def _init():
        sum_ref[...] = part_sum
        max_ref[...] = part_max

    @pl.when(c_idx != 0)
    def _accumulate():
        sum_ref[...] = sum_ref[...] + part_sum
        max_ref[...] = jnp.maximum(max_ref[...], part_max)

    @pl.when(c_idx == pl.num_programs(1) - 1)
    def _finalize():
        # 1/C is folded into T's avg rows, so sum feeds the MXU directly.
        lhs = jnp.concatenate([sum_ref[...], max_ref[...]], axis=-1)  # (nb, 2*HW)
        conv = jnp.dot(lhs.astype(t_ref.dtype), t_ref[...],
                       preferred_element_type=jnp.float32)
        o_ref[...] = jax.nn.sigmoid(conv).astype(o_ref.dtype)


def _largest_divisor_tile(total, cap, quantum):
    """Largest tile <= cap that divides `total` and is a multiple of `quantum`
    (or `total` itself if it already fits / no suitable divisor exists)."""
    if total <= cap:
        return total
    t = (cap // quantum) * quantum
    while t >= quantum:
        if total % t == 0:
            return t
        t -= quantum
    # TODO(synk): add in-kernel channel masking so awkward C (e.g. large primes)
    # can still be tiled; fall back to a single full-C block for now.
    return total


def _mxu_row_cap():
    """Batch-rows cap so the finalize matmul fills the MXU's LHS rows."""
    try:
        kind = jax.devices()[0].device_kind.lower()
    except Exception:
        return 128
    return 128 if any(v in kind for v in ("v2", "v3", "v4", "v5")) else 256


def spatial_attention(x, conv_weight):
    """x: (N, C, H, W); conv_weight: (1, 2, K, K), no bias. Returns (N, 1, H, W)."""
    N, C, H, W = x.shape
    HW = H * W
    x_flat = x.reshape(N, C, HW)                 # lane-dense last dim

    # TODO(synk): add a banded/row-tiled Toeplitz (or shift-MAC) path when HW
    # exceeds ~1024 — dense T is O(HW^2) and stops fitting v7x's 64 MiB VMEM
    # around 32x32-56x56 planes.
    # bf16 weights: MXU-native, halves T's DMA and VMEM residency; 1/C folded
    # into the avg-channel rows so the kernel needs no per-finalize scale.
    t = _conv_toeplitz(conv_weight, H, W,
                       channel_scale=(1.0 / C, 1.0)).astype(jnp.bfloat16)

    itemsize = jnp.dtype(x.dtype).itemsize
    t_bytes = t.size * t.dtype.itemsize          # single-buffered (Buffered(1))

    # Per-generation VMEM sizing: clamp below physical VMEM (v7x: 64 MiB),
    # and use much larger streamed-x windows on v5e/v6e (128 MiB VMEM).
    vmem_physical = 64 * 2**20                   # conservative fallback
    try:
        vmem_physical = int(pltpu.get_tpu_info().vmem_capacity_bytes)
    except Exception:
        pass
    vmem_ceiling = max(32 * 2**20, vmem_physical - 16 * 2**20)
    big_vmem = vmem_physical >= 96 * 2**20       # v5e / v6e class parts
    x_window_budget = (24 if big_vmem else 10) * 2**20
    x_window_budget = max(8 * 2**20,
                          min(x_window_budget, vmem_ceiling - t_bytes - 8 * 2**20))

    # Batch tile: large enough to fill MXU rows / amortize the ~0.35us per-step
    # overhead; kept a multiple of 8 (or == N) so the (nb, HW) output block is
    # sublane-aligned; split so the 'parallel' batch axis has >=2 programs when
    # N allows (v7x has 2 TensorCores).
    nb = min(N, _mxu_row_cap())
    if nb < N:
        nb = max(8, (nb // 8) * 8)
    if N >= 16:
        half = max(8, ((N // 2) // 8) * 8)
        nb = min(nb, half)
    min_tc = min(C, 8)
    while nb > 8 and 2 * nb * min_tc * HW * itemsize > x_window_budget:
        nb = max(8, ((nb // 2) // 8) * 8)

    tc_cap = max(min_tc, x_window_budget // (2 * nb * HW * itemsize))
    tc = _largest_divisor_tile(C, tc_cap, 8)     # channel chunk, divides C

    vmem_need = (2 * nb * tc * HW * itemsize     # double-buffered input window
                 + t_bytes                       # resident Toeplitz weights (x1)
                 + 2 * nb * HW * itemsize        # output window
                 + 2 * nb * HW * 4)              # f32 sum/max accumulators
    vmem_limit = int(min(vmem_ceiling, max(32 * 2**20, 2 * vmem_need)))

    out_flat = pl.pallas_call(
        _spatial_attention_kernel,
        out_shape=jax.ShapeDtypeStruct((N, HW), x.dtype),
        grid_spec=pltpu.PrefetchScalarGridSpec(
            num_scalar_prefetch=0,
            grid=(pl.cdiv(N, nb), C // tc),      # channel (reduction) axis last
            in_specs=[
                pl.BlockSpec((nb, tc, HW), lambda n, c: (n, c, 0)),
                # Constant index_map -> DMA'd once; single-buffer it so it does
                # not eat 2x VMEM.
                pl.BlockSpec((2 * HW, HW), lambda n, c: (0, 0),
                             pipeline_mode=pl.Buffered(1)),
            ],
            out_specs=pl.BlockSpec((nb, HW), lambda n, c: (n, 0)),
            scratch_shapes=[
                pltpu.VMEM((nb, HW), jnp.float32),   # running channel sum
                pltpu.VMEM((nb, HW), jnp.float32),   # running channel max
            ],
        ),
        compiler_params=pltpu.CompilerParams(
            dimension_semantics=("parallel", "arbitrary"),
            vmem_limit_bytes=vmem_limit,
        ),
    )(x_flat, t)

    return out_flat.reshape(N, 1, H, W)


def _reference(x, conv_weight):
    """Pure-JAX reference for correctness checking (full f32 precision)."""
    avg = jnp.mean(x, axis=1, keepdims=True)
    mx = jnp.max(x, axis=1, keepdims=True)
    cat = jnp.concatenate([avg, mx], axis=1)         # (N, 2, H, W)
    y = lax.conv_general_dilated(
        cat.astype(jnp.float32),
        conv_weight.astype(jnp.float32),
        window_strides=(1, 1),
        padding=((PAD, PAD), (PAD, PAD)),
        dimension_numbers=("NCHW", "OIHW", "NCHW"),
        precision=lax.Precision.HIGHEST,
    )
    return jax.nn.sigmoid(y)


if __name__ == "__main__":
    key = jax.random.PRNGKey(0)
    kx, kw = jax.random.split(key)

    N, C, H, W = 2, 4, 16, 16
    x = jax.random.normal(kx, (N, C, H, W), dtype=jnp.float32)

    # Deterministic synthetic conv1 weights: (out=1, in=2, K, K), no bias.
    fan_in = 2 * KERNEL_SIZE * KERNEL_SIZE
    bound = 1.0 / np.sqrt(fan_in)
    conv_weight = jax.random.uniform(
        kw, (1, 2, KERNEL_SIZE, KERNEL_SIZE),
        minval=-bound, maxval=bound, dtype=jnp.float32,
    )

    out = jax.block_until_ready(spatial_attention(x, conv_weight))
    ref = jax.block_until_ready(_reference(x, conv_weight))
    # Tolerance accounts for the bf16 MXU conv path (per perf review: dropped
    # HIGHEST-precision f32 emulation, bf16 Toeplitz weights + bf16 LHS).
    np.testing.assert_allclose(np.asarray(out), np.asarray(ref),
                               rtol=1e-2, atol=1e-2)

    print("KERNEL_OK")
</pallas_src>

<mosaic_0001>
module attributes {stable_mosaic.version = 11 : i64} {
  func.func @_spatial_attention_kernel(%arg0: i32, %arg1: i32, %arg2: memref<2x4x256xf32, #tpu.memory_space<vmem>>, %arg3: memref<512x256xbf16, #tpu.memory_space<vmem>>, %arg4: memref<2x256xf32, #tpu.memory_space<vmem>>, %arg5: memref<2x256xf32, #tpu.memory_space<vmem>>, %arg6: memref<2x256xf32, #tpu.memory_space<vmem>>) attributes {dimension_semantics = [#tpu.dimension_semantics<parallel>, #tpu.dimension_semantics<arbitrary>], iteration_bounds = array<i64: 1, 1>, scalar_prefetch = 0 : i64, scratch_operands = 2 : i64, tpu.core_type = #tpu.core_type<tc>, window_params = [{transform_indices = @transform_0, window_bounds = array<i64: 2, 4, 256>}, {pipeline_mode = #tpu.pipeline_mode<synchronous>, transform_indices = @transform_1, window_bounds = array<i64: 512, 256>}, {transform_indices = @transform_2, window_bounds = array<i64: 2, 256>}]} {
    %c0 = arith.constant 0 : index
    %c0_0 = arith.constant 0 : index
    %c0_1 = arith.constant 0 : index
    %0 = vector.load %arg2[%c0, %c0_0, %c0_1] : memref<2x4x256xf32, #tpu.memory_space<vmem>>, vector<2x4x256xf32>
    %cst = arith.constant dense<0.000000e+00> : vector<2x256xf32>
    %1 = vector.multi_reduction <add>, %0, %cst [1] : vector<2x4x256xf32> to vector<2x256xf32>
    %cst_2 = arith.constant dense<0xFF800000> : vector<2x256xf32>
    %2 = vector.multi_reduction <maximumf>, %0, %cst_2 [1] : vector<2x4x256xf32> to vector<2x256xf32>
    %c0_i32 = arith.constant 0 : i32
    %3 = arith.cmpi eq, %arg1, %c0_i32 : i32
    %4 = arith.extui %3 : i1 to i32
    %c0_i32_3 = arith.constant 0 : i32
    %5 = arith.cmpi ne, %4, %c0_i32_3 : i32
    scf.if %5 {
      %c0_8 = arith.constant 0 : index
      %c0_9 = arith.constant 0 : index
      %12 = vector.load %arg5[%c0_8, %c0_9] : memref<2x256xf32, #tpu.memory_space<vmem>>, vector<2x256xf32>
      tpu.vector_store %arg5[%c0_8, %c0_9], %1 {strides = array<i32>} : memref<2x256xf32, #tpu.memory_space<vmem>>, vector<2x256xf32>,
      %c0_10 = arith.constant 0 : index
      %c0_11 = arith.constant 0 : index
      %13 = vector.load %arg6[%c0_10, %c0_11] : memref<2x256xf32, #tpu.memory_space<vmem>>, vector<2x256xf32>
      tpu.vector_store %arg6[%c0_10, %c0_11], %2 {strides = array<i32>} : memref<2x256xf32, #tpu.memory_space<vmem>>, vector<2x256xf32>,
    } else {
    }
    %c0_i32_4 = arith.constant 0 : i32
    %6 = arith.cmpi ne, %arg1, %c0_i32_4 : i32
    %7 = arith.extui %6 : i1 to i32
    %c0_i32_5 = arith.constant 0 : i32
    %8 = arith.cmpi ne, %7, %c0_i32_5 : i32
    scf.if %8 {
      %c0_8 = arith.constant 0 : index
      %c0_9 = arith.constant 0 : index
      %12 = vector.load %arg5[%c0_8, %c0_9] : memref<2x256xf32, #tpu.memory_space<vmem>>, vector<2x256xf32>
      %13 = arith.addf %12, %1 : vector<2x256xf32>
      %c0_10 = arith.constant 0 : index
      %c0_11 = arith.constant 0 : index
      %14 = vector.load %arg5[%c0_10, %c0_11] : memref<2x256xf32, #tpu.memory_space<vmem>>, vector<2x256xf32>
      tpu.vector_store %arg5[%c0_10, %c0_11], %13 {strides = array<i32>} : memref<2x256xf32, #tpu.memory_space<vmem>>, vector<2x256xf32>,
      %c0_12 = arith.constant 0 : index
      %c0_13 = arith.constant 0 : index
      %15 = vector.load %arg6[%c0_12, %c0_13] : memref<2x256xf32, #tpu.memory_space<vmem>>, vector<2x256xf32>
      %16 = arith.maximumf %15, %2 : vector<2x256xf32>
      %c0_14 = arith.constant 0 : index
      %c0_15 = arith.constant 0 : index
      %17 = vector.load %arg6[%c0_14, %c0_15] : memref<2x256xf32, #tpu.memory_space<vmem>>, vector<2x256xf32>
      tpu.vector_store %arg6[%c0_14, %c0_15], %16 {strides = array<i32>} : memref<2x256xf32, #tpu.memory_space<vmem>>, vector<2x256xf32>,
    } else {
    }
    %c0_i32_6 = arith.constant 0 : i32
    %9 = arith.cmpi eq, %arg1, %c0_i32_6 : i32
    %10 = arith.extui %9 : i1 to i32
    %c0_i32_7 = arith.constant 0 : i32
    %11 = arith.cmpi ne, %10, %c0_i32_7 : i32
    scf.if %11 {
      %c0_8 = arith.constant 0 : index
      %c0_9 = arith.constant 0 : index
      %12 = vector.load %arg5[%c0_8, %c0_9] : memref<2x256xf32, #tpu.memory_space<vmem>>, vector<2x256xf32>
      %c0_10 = arith.constant 0 : index
      %c0_11 = arith.constant 0 : index
      %13 = vector.load %arg6[%c0_10, %c0_11] : memref<2x256xf32, #tpu.memory_space<vmem>>, vector<2x256xf32>
      %14 = tpu.concatenate %12, %13 in 1 : vector<2x256xf32>, vector<2x256xf32> -> vector<2x512xf32>
      %15 = arith.truncf %14 : vector<2x512xf32> to vector<2x512xbf16>
      %c0_12 = arith.constant 0 : index
      %c0_13 = arith.constant 0 : index
      %16 = vector.load %arg3[%c0_12, %c0_13] : memref<512x256xbf16, #tpu.memory_space<vmem>>, vector<512x256xbf16>
      %cst_14 = arith.constant dense<0.000000e+00> : vector<2x256xf32>
      %17 = tpu.matmul %15, %16, %cst_14 {dimension_numbers = #tpu.dot_dimension_numbers<[1], [0], [0], [1], [0, 0, 1, 1], [], []>} : vector<2x512xbf16>, vector<512x256xbf16>, vector<2x256xf32> -> vector<2x256xf32>
      %18 = arith.negf %17 : vector<2x256xf32>
      %19 = math.exp %18 : vector<2x256xf32>
      %cst_15 = arith.constant 1.000000e+00 : f32
      %20 = vector.broadcast %cst_15 : f32 to vector<2x256xf32>
      %21 = arith.addf %20, %19 : vector<2x256xf32>
      %22 = arith.divf %20, %21 : vector<2x256xf32>
      %c0_16 = arith.constant 0 : index
      %c0_17 = arith.constant 0 : index
      %23 = vector.load %arg4[%c0_16, %c0_17] : memref<2x256xf32, #tpu.memory_space<vmem>>, vector<2x256xf32>
      tpu.vector_store %arg4[%c0_16, %c0_17], %22 {strides = array<i32>} : memref<2x256xf32, #tpu.memory_space<vmem>>, vector<2x256xf32>,
    } else {
    }
    return
  }
  func.func @transform_0(%arg0: i32, %arg1: i32) -> (i32, i32, i32) {
    %c0_i32 = arith.constant 0 : i32
    %c0_i32_0 = arith.constant 0 : i32
    return %arg0, %arg1, %c0_i32 : i32, i32, i32
  }
  func.func @transform_1(%arg0: i32, %arg1: i32) -> (i32, i32) {
    %c0_i32 = arith.constant 0 : i32
    %c0_i32_0 = arith.constant 0 : i32
    %c0_i32_1 = arith.constant 0 : i32
    return %c0_i32, %c0_i32_0 : i32, i32
  }
  func.func @transform_2(%arg0: i32, %arg1: i32) -> (i32, i32) {
    %c0_i32 = arith.constant 0 : i32
    %c0_i32_0 = arith.constant 0 : i32
    return %arg0, %c0_i32 : i32, i32
  }
}

</mosaic_0001>

<llo_original>
// kernel: tpu_custom_call.1
$region0: #{tpu_custom_call.1}
  #allocation0 [shape = 'u32[]', space=smem, size = 0x4, offset = 0x4, fixed_abs, tag = 'smem constant byte address 0x4 - core index']
  #allocation1 [shape = 'u32[144,128]{1,0:T(1,128)}', space=vmem, size = 0x12000, scoped, tag = 'internal scratch']
  #allocation2 [shape = 'f32[2,256]{1,0:T(2,128)}', space=vmem, size = 0x800, scoped, tag = 'scratch operand']
  #allocation3 [shape = 'f32[2,256]{1,0:T(2,128)}', space=vmem, size = 0x800, scoped, tag = 'scratch operand']
  %s0 = inlined_call_operand.hbm [shape: f32[2,4,256], index: 0, kind: input, shape index: {}]
  %s1 = inlined_call_operand.hbm [shape: bf16[512,256], index: 1, kind: input, shape index: {}]
  %s2 = inlined_call_operand.hbm [shape: f32[2,256], index: 2, kind: output, shape index: {}]
  %s3 = sld [smem:[#allocation0]]
  $region38: #{tpu_custom_call.1} parent=0
    _
  %s5 = ssub.s32 1, %s3
  %s6 = scalar_select 0, %s5, %s3
  $region1: #{tpu_custom_call.1} parent=0
    #allocation4 [shape = 'u8[8192]{0}', space=vmem, size = 0x2000, scoped, tag = 'input window, operand 0, single buffered']
    #allocation5 [shape = 's32[1]{0}', space=sflag, size = 0x4, scoped, tag = 'scoped memory for tpu_custom_call.1']
    #allocation6 [shape = 's32[1]{0}', space=sflag, size = 0x4, scoped, tag = 'scoped memory for tpu_custom_call.1']
    #allocation7 [shape = 'u8[262144]{0}', space=vmem, size = 0x40000, scoped, tag = 'input window, operand 1, single buffered']
    #allocation8 [shape = 's32[1]{0}', space=sflag, size = 0x4, scoped, tag = 'scoped memory for tpu_custom_call.1']
    #allocation9 [shape = 'u8[2048]{0}', space=vmem, size = 0x800, scoped, tag = 'output window, operand 0, single buffered']
    %7 = vsyncpa [#allocation5], 0
    %8 = vsyncpa [#allocation8], 0
    %9 = vsyncpa [#allocation6], 0
    // Predicated region
    $region2: #{tpu_custom_call.1} parent=1 // pred_check
      _
    $region3: #{tpu_custom_call.1} parent=1 // pred_check_branch
      %11 = sbr.rel (0) target = $region5
    $region4: #{tpu_custom_call.1} parent=1 // pred_region
      %s13 = ssub.s32 256, 256
      %14 = vsyncadd [#allocation5], %s13
      %s15 = sshll.u32 [#allocation4], 4
      %s16 = int_to_ptr.vmem [resolvable:$true] %s15
      %21 = dma.hbm_to_vmem [thread:$0]  %s0, 256, %s16, [#allocation5], 128, 128, 8
    $region5: #{tpu_custom_call.1} parent=1 // pred_fallthru
      _
    // Predicated region
    $region6: #{tpu_custom_call.1} parent=1 // pred_check
      _
    $region7: #{tpu_custom_call.1} parent=1 // pred_check_branch
      %23 = sbr.rel (0) target = $region9
    $region8: #{tpu_custom_call.1} parent=1 // pred_region
      %s25 = ssub.s32 8192, 8192
      %26 = vsyncadd [#allocation8], %s25
      %s27 = sshll.u32 [#allocation7], 4
      %s28 = int_to_ptr.vmem [resolvable:$true] %s27
      %33 = dma.hbm_to_vmem [thread:$0]  %s1, 8192, %s28, [#allocation8], 128, 128, 8
    $region9: #{tpu_custom_call.1} parent=1 // pred_fallthru
      _
    // Predicated region
    $region10: #{tpu_custom_call.1} parent=1 // pred_check
      _
    $region11: #{tpu_custom_call.1} parent=1 // pred_check_branch
      %35 = sbr.rel (0) target = $region13
    $region12: #{tpu_custom_call.1} parent=1 // pred_region
      %36 = dma.done [#allocation5], 256
    $region13: #{tpu_custom_call.1} parent=1 // pred_fallthru
      _
    // Predicated region
    $region14: #{tpu_custom_call.1} parent=1 // pred_check
      _
    $region15: #{tpu_custom_call.1} parent=1 // pred_check_branch
      %38 = sbr.rel (0) target = $region17
    $region16: #{tpu_custom_call.1} parent=1 // pred_region
      %39 = dma.done [#allocation8], 8192
    $region17: #{tpu_custom_call.1} parent=1 // pred_fallthru
      _
    %v40 = vld [vmem:[#allocation4] sm:$0xff]
    %v41 = vld [vmem:[#allocation4 + $0x8] sm:$0xff]
    %v44 = vcombine.high %v40, %v40
    %v45 = vcombine.high %v41, %v41
    %vm48 = vcmask 1043456
    %v49 = vsel %vm48, %v40, 0.0
    %v50 = vrot.slane %v49, 4
    %v51 = vadd.f32 %v49, %v50
    %v52 = vrot.slane %v51, 2
    %v53 = vadd.f32 %v51, %v52
    %v54 = vrot.slane %v53, 1
    %v55 = vadd.f32 %v53, %v54
    %v56 = vsel %vm48, %v44, 0.0
    %v57 = vrot.slane %v56, 4
    %v58 = vadd.f32 %v56, %v57
    %v59 = vrot.slane %v58, 2
    %v60 = vadd.f32 %v58, %v59
    %v61 = vrot.slane %v60, 1
    %v62 = vadd.f32 %v60, %v61
    %v63 = vsel %vm48, %v41, 0.0
    %v64 = vrot.slane %v63, 4
    %v65 = vadd.f32 %v63, %v64
    %v66 = vrot.slane %v65, 2
    %v67 = vadd.f32 %v65, %v66
    %v68 = vrot.slane %v67, 1
    %v69 = vadd.f32 %v67, %v68
    %v70 = vsel %vm48, %v45, 0.0
    %v71 = vrot.slane %v70, 4
    %v72 = vadd.f32 %v70, %v71
    %v73 = vrot.slane %v72, 2
    %v74 = vadd.f32 %v72, %v73
    %v75 = vrot.slane %v74, 1
    %v76 = vadd.f32 %v74, %v75
    %v77 = vsel %vm48, %v40, -inf
    %v78 = vrot.slane %v77, 4
    %v79 = vmax.f32 %v77, %v78
    %v80 = vrot.slane %v79, 2
    %v81 = vmax.f32 %v79, %v80
    %v82 = vrot.slane %v81, 1
    %v83 = vmax.f32 %v81, %v82
    %v84 = vsel %vm48, %v44, -inf
    %v85 = vrot.slane %v84, 4
    %v86 = vmax.f32 %v84, %v85
    %v87 = vrot.slane %v86, 2
    %v88 = vmax.f32 %v86, %v87
    %v89 = vrot.slane %v88, 1
    %v90 = vmax.f32 %v88, %v89
    %v91 = vsel %vm48, %v41, -inf
    %v92 = vrot.slane %v91, 4
    %v93 = vmax.f32 %v91, %v92
    %v94 = vrot.slane %v93, 2
    %v95 = vmax.f32 %v93, %v94
    %v96 = vrot.slane %v95, 1
    %v97 = vmax.f32 %v95, %v96
    %v98 = vsel %vm48, %v45, -inf
    %v99 = vrot.slane %v98, 4
    %v100 = vmax.f32 %v98, %v99
    %v101 = vrot.slane %v100, 2
    %v102 = vmax.f32 %v100, %v101
    %v103 = vrot.slane %v102, 1
    %v104 = vmax.f32 %v102, %v103
    %p105 = scmp.eq.s32.totalorder 0, 0
    // Predicated region
    $region18: #{tpu_custom_call.1} parent=1 // pred_check
      %p106 = pneg %p105
    $region19: #{tpu_custom_call.1} parent=1 // pred_check_branch
      %108 = sbr.rel (%p106) target = $region21
    $region20: #{tpu_custom_call.1} parent=1 // pred_region
      %v113 = vcombine.low %v55, %v62
      %v115 = vunpack.c.l.s4 1983009808
      %v116 = vunpack.c.0.s8 %v115
      %v117 = vlaneseq
      %v118 = vshrl.u32 %v117, 7
      %v119 = vsub.s32 %v116, %v118
      %v120 = vrot.slane %v113, %v119
      %v121 = vcombine.low %v69, %v76
      %v123 = vunpack.c.l.s4 1983009808
      %v124 = vunpack.c.0.s8 %v123
      %v125 = vlaneseq
      %v126 = vshrl.u32 %v125, 7
      %v127 = vsub.s32 %v124, %v126
      %v128 = vrot.slane %v121, %v127
      %vm129 = vcmask 1044484
      %v130 = vsel %vm129, %v120, %v120
      %vm131 = vcmask 1046534
      %v132 = vsel %vm131, %v120, %v130
      %v133 = vrot.slane %v128, 7
      %vm134 = vcmask 1041409
      %v135 = vsel %vm134, %v133, %v132
      %vm136 = vcmask 1043459
      %v137 = vsel %vm136, %v133, %v135
      %vm138 = vcmask 1045509
      %v139 = vsel %vm138, %v133, %v137
      %vm140 = vcmask 1047559
      %v141 = vsel %vm140, %v133, %v139
      %143 = vst [vmem:[#allocation2] sm:$0xf] %v141
      %v148 = vcombine.low %v83, %v90
      %v150 = vunpack.c.l.s4 1983009808
      %v151 = vunpack.c.0.s8 %v150
      %v152 = vlaneseq
      %v153 = vshrl.u32 %v152, 7
      %v154 = vsub.s32 %v151, %v153
      %v155 = vrot.slane %v148, %v154
      %v156 = vcombine.low %v97, %v104
      %v158 = vunpack.c.l.s4 1983009808
      %v159 = vunpack.c.0.s8 %v158
      %v160 = vlaneseq
      %v161 = vshrl.u32 %v160, 7
      %v162 = vsub.s32 %v159, %v161
      %v163 = vrot.slane %v156, %v162
      %v164 = vsel %vm129, %v155, %v155
      %v165 = vsel %vm131, %v155, %v164
      %v166 = vrot.slane %v163, 7
      %v167 = vsel %vm134, %v166, %v165
      %v168 = vsel %vm136, %v166, %v167
      %v169 = vsel %vm138, %v166, %v168
      %v170 = vsel %vm140, %v166, %v169
      %172 = vst [vmem:[#allocation3] sm:$0xf] %v170
    $region21: #{tpu_custom_call.1} parent=1 // pred_fallthru
      _
    %p173 = scmp.ne.s32.totalorder 0, 0
    // Predicated region
    $region22: #{tpu_custom_call.1} parent=1 // pred_check
      %p174 = pneg %p173
    $region23: #{tpu_custom_call.1} parent=1 // pred_check_branch
      %176 = sbr.rel (%p174) target = $region25
    $region24: #{tpu_custom_call.1} parent=1 // pred_region
      %v177 = vld [vmem:[#allocation2] sm:$0xf]
      %v182 = vcombine.low %v55, %v62
      %v184 = vunpack.c.l.s4 1983009808
      %v185 = vunpack.c.0.s8 %v184
      %v186 = vlaneseq
      %v187 = vshrl.u32 %v186, 7
      %v188 = vsub.s32 %v185, %v187
      %v189 = vrot.slane %v182, %v188
      %v190 = vcombine.low %v69, %v76
      %v192 = vunpack.c.l.s4 1983009808
      %v193 = vunpack.c.0.s8 %v192
      %v194 = vlaneseq
      %v195 = vshrl.u32 %v194, 7
      %v196 = vsub.s32 %v193, %v195
      %v197 = vrot.slane %v190, %v196
      %vm198 = vcmask 1044484
      %v199 = vsel %vm198, %v189, %v189
      %vm200 = vcmask 1046534
      %v201 = vsel %vm200, %v189, %v199
      %v202 = vrot.slane %v197, 7
      %vm203 = vcmask 1041409
      %v204 = vsel %vm203, %v202, %v201
      %vm205 = vcmask 1043459
      %v206 = vsel %vm205, %v202, %v204
      %vm207 = vcmask 1045509
      %v208 = vsel %vm207, %v202, %v206
      %vm209 = vcmask 1047559
      %v210 = vsel %vm209, %v202, %v208
      %v212 = vadd.f32 %v177, %v210
      %213 = vst [vmem:[#allocation2] sm:$0xf] %v212
      %v214 = vld [vmem:[#allocation3] sm:$0xf]
      %v219 = vcombine.low %v83, %v90
      %v221 = vunpack.c.l.s4 1983009808
      %v222 = vunpack.c.0.s8 %v221
      %v223 = vlaneseq
      %v224 = vshrl.u32 %v223, 7
      %v225 = vsub.s32 %v222, %v224
      %v226 = vrot.slane %v219, %v225
      %v227 = vcombine.low %v97, %v104
      %v229 = vunpack.c.l.s4 1983009808
      %v230 = vunpack.c.0.s8 %v229
      %v231 = vlaneseq
      %v232 = vshrl.u32 %v231, 7
      %v233 = vsub.s32 %v230, %v232
      %v234 = vrot.slane %v227, %v233
      %v235 = vsel %vm198, %v226, %v226
      %v236 = vsel %vm200, %v226, %v235
      %v237 = vrot.slane %v234, 7
      %v238 = vsel %vm203, %v237, %v236
      %v239 = vsel %vm205, %v237, %v238
      %v240 = vsel %vm207, %v237, %v239
      %v241 = vsel %vm209, %v237, %v240
      %v243 = vmax.f32 %v214, %v241
      %244 = vst [vmem:[#allocation3] sm:$0xf] %v243
    $region25: #{tpu_custom_call.1} parent=1 // pred_fallthru
      _
    // Predicated region
    $region26: #{tpu_custom_call.1} parent=1 // pred_check
      %p245 = pneg %p105
    $region27: #{tpu_custom_call.1} parent=1 // pred_check_branch
      %247 = sbr.rel (%p245) target = $region29
    $region28: #{tpu_custom_call.1} parent=1 // pred_region
      %v248 = vld [vmem:[#allocation2] sm:$0xf]
      %v249 = vld [vmem:[#allocation3] sm:$0xf]
      %v252 = vunpack.c.l.s4 1983009808
      %v253 = vunpack.c.0.s8 %v252
      %v254 = vlaneseq
      %v255 = vshrl.u32 %v254, 7
      %v256 = vsub.s32 %v253, %v255
      %v257 = vrot.slane %v248, %v256
      %v258 = vcombine.high %v257, %v257
      %v263 = vunpack.c.l.s4 1983009808
      %v264 = vunpack.c.0.s8 %v263
      %v265 = vlaneseq
      %v266 = vshrl.u32 %v265, 7
      %v267 = vsub.s32 %v264, %v266
      %v268 = vrot.slane %v249, %v267
      %v269 = vcombine.high %v268, %v268
      %v272 = vpack.c.bf16 %v257, %v257
      %v273 = vpack.c.bf16 %v258, %v258
      %v274 = vpack.c.bf16 %v268, %v268
      %v275 = vpack.c.bf16 %v269, %v269
      %v276 = vld [vmem:[#allocation7] sm:$0xff]
      %v277 = vld [vmem:[#allocation7 + $0x8] sm:$0xff]
      %v278 = vld [vmem:[#allocation7 + $0x10] sm:$0xff]
      %v279 = vld [vmem:[#allocation7 + $0x18] sm:$0xff]
      %v280 = vld [vmem:[#allocation7 + $0x20] sm:$0xff]
      %v281 = vld [vmem:[#allocation7 + $0x28] sm:$0xff]
      %v282 = vld [vmem:[#allocation7 + $0x30] sm:$0xff]
      %v283 = vld [vmem:[#allocation7 + $0x38] sm:$0xff]
      %v284 = vld [vmem:[#allocation7 + $0x40] sm:$0xff]
      %v285 = vld [vmem:[#allocation7 + $0x48] sm:$0xff]
      %v286 = vld [vmem:[#allocation7 + $0x50] sm:$0xff]
      %v287 = vld [vmem:[#allocation7 + $0x58] sm:$0xff]
      %v288 = vld [vmem:[#allocation7 + $0x60] sm:$0xff]
      %v289 = vld [vmem:[#allocation7 + $0x68] sm:$0xff]
      %v290 = vld [vmem:[#allocation7 + $0x70] sm:$0xff]
      %v291 = vld [vmem:[#allocation7 + $0x78] sm:$0xff]
      %v292 = vld [vmem:[#allocation7 + $0x80] sm:$0xff]
      %v293 = vld [vmem:[#allocation7 + $0x88] sm:$0xff]
      %v294 = vld [vmem:[#allocation7 + $0x90] sm:$0xff]
      %v295 = vld [vmem:[#allocation7 + $0x98] sm:$0xff]
      %v296 = vld [vmem:[#allocation7 + $0xa0] sm:$0xff]
      %v297 = vld [vmem:[#allocation7 + $0xa8] sm:$0xff]
      %v298 = vld [vmem:[#allocation7 + $0xb0] sm:$0xff]
      %v299 = vld [vmem:[#allocation7 + $0xb8] sm:$0xff]
      %v300 = vld [vmem:[#allocation7 + $0xc0] sm:$0xff]
      %v301 = vld [vmem:[#allocation7 + $0xc8] sm:$0xff]
      %v302 = vld [vmem:[#allocation7 + $0xd0] sm:$0xff]
      %v303 = vld [vmem:[#allocation7 + $0xd8] sm:$0xff]
      %v304 = vld [vmem:[#allocation7 + $0xe0] sm:$0xff]
      %v305 = vld [vmem:[#allocation7 + $0xe8] sm:$0xff]
      %v306 = vld [vmem:[#allocation7 + $0xf0] sm:$0xff]
      %v307 = vld [vmem:[#allocation7 + $0xf8] sm:$0xff]
      %v308 = vld [vmem:[#allocation7 + $0x100] sm:$0xff]
      %v309 = vld [vmem:[#allocation7 + $0x108] sm:$0xff]
      %v310 = vld [vmem:[#allocation7 + $0x110] sm:$0xff]
      %v311 = vld [vmem:[#allocation7 + $0x118] sm:$0xff]
      %v312 = vld [vmem:[#allocation7 + $0x120] sm:$0xff]
      %v313 = vld [vmem:[#allocation7 + $0x128] sm:$0xff]
      %v314 = vld [vmem:[#allocation7 + $0x130] sm:$0xff]
      %v315 = vld [vmem:[#allocation7 + $0x138] sm:$0xff]
      %v316 = vld [vmem:[#allocation7 + $0x140] sm:$0xff]
      %v317 = vld [vmem:[#allocation7 + $0x148] sm:$0xff]
      %v318 = vld [vmem:[#allocation7 + $0x150] sm:$0xff]
      %v319 = vld [vmem:[#allocation7 + $0x158] sm:$0xff]
      %v320 = vld [vmem:[#allocation7 + $0x160] sm:$0xff]
      %v321 = vld [vmem:[#allocation7 + $0x168] sm:$0xff]
      %v322 = vld [vmem:[#allocation7 + $0x170] sm:$0xff]
      %v323 = vld [vmem:[#allocation7 + $0x178] sm:$0xff]
      %v324 = vld [vmem:[#allocation7 + $0x180] sm:$0xff]
      %v325 = vld [vmem:[#allocation7 + $0x188] sm:$0xff]
      %v326 = vld [vmem:[#allocation7 + $0x190] sm:$0xff]
      %v327 = vld [vmem:[#allocation7 + $0x198] sm:$0xff]
      %v328 = vld [vmem:[#allocation7 + $0x1a0] sm:$0xff]
      %v329 = vld [vmem:[#allocation7 + $0x1a8] sm:$0xff]
      %v330 = vld [vmem:[#allocation7 + $0x1b0] sm:$0xff]
      %v331 = vld [vmem:[#allocation7 + $0x1b8] sm:$0xff]
      %v332 = vld [vmem:[#allocation7 + $0x1c0] sm:$0xff]
      %v333 = vld [vmem:[#allocation7 + $0x1c8] sm:$0xff]
      %v334 = vld [vmem:[#allocation7 + $0x1d0] sm:$0xff]
      %v335 = vld [vmem:[#allocation7 + $0x1d8] sm:$0xff]
      %v336 = vld [vmem:[#allocation7 + $0x1e0] sm:$0xff]
      %v337 = vld [vmem:[#allocation7 + $0x1e8] sm:$0xff]
      %v338 = vld [vmem:[#allocation7 + $0x1f0] sm:$0xff]
      %v339 = vld [vmem:[#allocation7 + $0x1f8] sm:$0xff]
      %v404 = vunpack.c.l.b16 %v276
      %v405 = vunpack.c.h.b16 %v276
      %v406 = vunpack.c.l.b16 %v277
      %v407 = vunpack.c.h.b16 %v277
      %v408 = vunpack.c.l.b16 %v278
      %v409 = vunpack.c.h.b16 %v278
      %v410 = vunpack.c.l.b16 %v279
      %v411 = vunpack.c.h.b16 %v279
      %v412 = vunpack.c.l.b16 %v280
      %v413 = vunpack.c.h.b16 %v280
      %v414 = vunpack.c.l.b16 %v281
      %v415 = vunpack.c.h.b16 %v281
      %v416 = vunpack.c.l.b16 %v282
      %v417 = vunpack.c.h.b16 %v282
      %v418 = vunpack.c.l.b16 %v283
      %v419 = vunpack.c.h.b16 %v283
      %v420 = vunpack.c.l.b16 %v284
      %v421 = vunpack.c.h.b16 %v284
      %v422 = vunpack.c.l.b16 %v285
      %v423 = vunpack.c.h.b16 %v285
      %v424 = vunpack.c.l.b16 %v286
      %v425 = vunpack.c.h.b16 %v286
      %v426 = vunpack.c.l.b16 %v287
      %v427 = vunpack.c.h.b16 %v287
      %v428 = vunpack.c.l.b16 %v288
      %v429 = vunpack.c.h.b16 %v288
      %v430 = vunpack.c.l.b16 %v289
      %v431 = vunpack.c.h.b16 %v289
      %v432 = vunpack.c.l.b16 %v290
      %v433 = vunpack.c.h.b16 %v290
      %v434 = vunpack.c.l.b16 %v291
      %v435 = vunpack.c.h.b16 %v291
      %v436 = vunpack.c.l.b16 %v292
      %v437 = vunpack.c.h.b16 %v292
      %v438 = vunpack.c.l.b16 %v293
      %v439 = vunpack.c.h.b16 %v293
      %v440 = vunpack.c.l.b16 %v294
      %v441 = vunpack.c.h.b16 %v294
      %v442 = vunpack.c.l.b16 %v295
      %v443 = vunpack.c.h.b16 %v295
      %v444 = vunpack.c.l.b16 %v296
      %v445 = vunpack.c.h.b16 %v296
      %v446 = vunpack.c.l.b16 %v297
      %v447 = vunpack.c.h.b16 %v297
      %v448 = vunpack.c.l.b16 %v298
      %v449 = vunpack.c.h.b16 %v298
      %v450 = vunpack.c.l.b16 %v299
      %v451 = vunpack.c.h.b16 %v299
      %v452 = vunpack.c.l.b16 %v300
      %v453 = vunpack.c.h.b16 %v300
      %v454 = vunpack.c.l.b16 %v301
      %v455 = vunpack.c.h.b16 %v301
      %v456 = vunpack.c.l.b16 %v302
      %v457 = vunpack.c.h.b16 %v302
      %v458 = vunpack.c.l.b16 %v303
      %v459 = vunpack.c.h.b16 %v303
      %v460 = vunpack.c.l.b16 %v304
      %v461 = vunpack.c.h.b16 %v304
      %v462 = vunpack.c.l.b16 %v305
      %v463 = vunpack.c.h.b16 %v305
      %v464 = vunpack.c.l.b16 %v306
      %v465 = vunpack.c.h.b16 %v306
      %v466 = vunpack.c.l.b16 %v307
      %v467 = vunpack.c.h.b16 %v307
      %v468 = vunpack.c.l.b16 %v308
      %v469 = vunpack.c.h.b16 %v308
      %v470 = vunpack.c.l.b16 %v309
      %v471 = vunpack.c.h.b16 %v309
      %v472 = vunpack.c.l.b16 %v310
      %v473 = vunpack.c.h.b16 %v310
      %v474 = vunpack.c.l.b16 %v311
      %v475 = vunpack.c.h.b16 %v311
      %v476 = vunpack.c.l.b16 %v312
      %v477 = vunpack.c.h.b16 %v312
      %v478 = vunpack.c.l.b16 %v313
      %v479 = vunpack.c.h.b16 %v313
      %v480 = vunpack.c.l.b16 %v314
      %v481 = vunpack.c.h.b16 %v314
      %v482 = vunpack.c.l.b16 %v315
      %v483 = vunpack.c.h.b16 %v315
      %v484 = vunpack.c.l.b16 %v316
      %v485 = vunpack.c.h.b16 %v316
      %v486 = vunpack.c.l.b16 %v317
      %v487 = vunpack.c.h.b16 %v317
      %v488 = vunpack.c.l.b16 %v318
      %v489 = vunpack.c.h.b16 %v318
      %v490 = vunpack.c.l.b16 %v319
      %v491 = vunpack.c.h.b16 %v319
      %v492 = vunpack.c.l.b16 %v320
      %v493 = vunpack.c.h.b16 %v320
      %v494 = vunpack.c.l.b16 %v321
      %v495 = vunpack.c.h.b16 %v321
      %v496 = vunpack.c.l.b16 %v322
      %v497 = vunpack.c.h.b16 %v322
      %v498 = vunpack.c.l.b16 %v323
      %v499 = vunpack.c.h.b16 %v323
      %v500 = vunpack.c.l.b16 %v324
      %v501 = vunpack.c.h.b16 %v324
      %v502 = vunpack.c.l.b16 %v325
      %v503 = vunpack.c.h.b16 %v325
      %v504 = vunpack.c.l.b16 %v326
      %v505 = vunpack.c.h.b16 %v326
      %v506 = vunpack.c.l.b16 %v327
      %v507 = vunpack.c.h.b16 %v327
      %v508 = vunpack.c.l.b16 %v328
      %v509 = vunpack.c.h.b16 %v328
      %v510 = vunpack.c.l.b16 %v329
      %v511 = vunpack.c.h.b16 %v329
      %v512 = vunpack.c.l.b16 %v330
      %v513 = vunpack.c.h.b16 %v330
      %v514 = vunpack.c.l.b16 %v331
      %v515 = vunpack.c.h.b16 %v331
      %v516 = vunpack.c.l.b16 %v332
      %v517 = vunpack.c.h.b16 %v332
      %v518 = vunpack.c.l.b16 %v333
      %v519 = vunpack.c.h.b16 %v333
      %v520 = vunpack.c.l.b16 %v334
      %v521 = vunpack.c.h.b16 %v334
      %v522 = vunpack.c.l.b16 %v335
      %v523 = vunpack.c.h.b16 %v335
      %v524 = vunpack.c.l.b16 %v336
      %v525 = vunpack.c.h.b16 %v336
      %v526 = vunpack.c.l.b16 %v337
      %v527 = vunpack.c.h.b16 %v337
      %v528 = vunpack.c.l.b16 %v338
      %v529 = vunpack.c.h.b16 %v338
      %v530 = vunpack.c.l.b16 %v339
      %v531 = vunpack.c.h.b16 %v339
      %v532 = vpack.c.b16 %v406, %v404
      %v533 = vpack.c.b16 %v407, %v405
      %v534 = vpack.c.b16 %v410, %v408
      %v535 = vpack.c.b16 %v411, %v409
      %v536 = vpack.c.b16 %v414, %v412
      %v537 = vpack.c.b16 %v415, %v413
      %v538 = vpack.c.b16 %v418, %v416
      %v539 = vpack.c.b16 %v419, %v417
      %v540 = vpack.c.b16 %v422, %v420
      %v541 = vpack.c.b16 %v423, %v421
      %v542 = vpack.c.b16 %v426, %v424
      %v543 = vpack.c.b16 %v427, %v425
      %v544 = vpack.c.b16 %v430, %v428
      %v545 = vpack.c.b16 %v431, %v429
      %v546 = vpack.c.b16 %v434, %v432
      %v547 = vpack.c.b16 %v435, %v433
      %v548 = vpack.c.b16 %v438, %v436
      %v549 = vpack.c.b16 %v439, %v437
      %v550 = vpack.c.b16 %v442, %v440
      %v551 = vpack.c.b16 %v443, %v441
      %v552 = vpack.c.b16 %v446, %v444
      %v553 = vpack.c.b16 %v447, %v445
      %v554 = vpack.c.b16 %v450, %v448
      %v555 = vpack.c.b16 %v451, %v449
      %v556 = vpack.c.b16 %v454, %v452
      %v557 = vpack.c.b16 %v455, %v453
      %v558 = vpack.c.b16 %v458, %v456
      %v559 = vpack.c.b16 %v459, %v457
      %v560 = vpack.c.b16 %v462, %v460
      %v561 = vpack.c.b16 %v463, %v461
      %v562 = vpack.c.b16 %v466, %v464
      %v563 = vpack.c.b16 %v467, %v465
      %v564 = vpack.c.b16 %v470, %v468
      %v565 = vpack.c.b16 %v471, %v469
      %v566 = vpack.c.b16 %v474, %v472
      %v567 = vpack.c.b16 %v475, %v473
      %v568 = vpack.c.b16 %v478, %v476
      %v569 = vpack.c.b16 %v479, %v477
      %v570 = vpack.c.b16 %v482, %v480
      %v571 = vpack.c.b16 %v483, %v481
      %v572 = vpack.c.b16 %v486, %v484
      %v573 = vpack.c.b16 %v487, %v485
      %v574 = vpack.c.b16 %v490, %v488
      %v575 = vpack.c.b16 %v491, %v489
      %v576 = vpack.c.b16 %v494, %v492
      %v577 = vpack.c.b16 %v495, %v493
      %v578 = vpack.c.b16 %v498, %v496
      %v579 = vpack.c.b16 %v499, %v497
      %v580 = vpack.c.b16 %v502, %v500
      %v581 = vpack.c.b16 %v503, %v501
      %v582 = vpack.c.b16 %v506, %v504
      %v583 = vpack.c.b16 %v507, %v505
      %v584 = vpack.c.b16 %v510, %v508
      %v585 = vpack.c.b16 %v511, %v509
      %v586 = vpack.c.b16 %v514, %v512
      %v587 = vpack.c.b16 %v515, %v513
      %v588 = vpack.c.b16 %v518, %v516
      %v589 = vpack.c.b16 %v519, %v517
      %v590 = vpack.c.b16 %v522, %v520
      %v591 = vpack.c.b16 %v523, %v521
      %v592 = vpack.c.b16 %v526, %v524
      %v593 = vpack.c.b16 %v527, %v525
      %v594 = vpack.c.b16 %v530, %v528
      %v595 = vpack.c.b16 %v531, %v529
      %660 = vmatprep.subr.bf16.mxu0 %v547
      %661 = vmatpush1.bf16.msra.mxu0 %v546
      %662 = vmatprep.subr.bf16.mxu0 %v545
      %663 = vmatpush1.bf16.msra.mxu0 %v544
      %664 = vmatprep.subr.bf16.mxu0 %v543
      %665 = vmatpush1.bf16.msra.mxu0 %v542
      %666 = vmatprep.subr.bf16.mxu0 %v541
      %667 = vmatpush1.bf16.msra.mxu0 %v540
      %668 = vmatprep.subr.bf16.mxu0 %v539
      %669 = vmatpush1.bf16.msra.mxu0 %v538
      %670 = vmatprep.subr.bf16.mxu0 %v537
      %671 = vmatpush1.bf16.msra.mxu0 %v536
      %672 = vmatprep.subr.bf16.mxu0 %v535
      %673 = vmatpush1.bf16.msra.mxu0 %v534
      %674 = vmatprep.subr.bf16.mxu0 %v533
      %675 = vmatpush1.bf16.msra.mxu0 %v532
      %676 = vmatprep.subr.bf16.mxu0 %v563
      %677 = vmatpush2.bf16.msra.mxu0 %v562
      %678 = vmatprep.subr.bf16.mxu0 %v561
      %679 = vmatpush2.bf16.msra.mxu0 %v560
      %680 = vmatprep.subr.bf16.mxu0 %v559
      %681 = vmatpush2.bf16.msra.mxu0 %v558
      %682 = vmatprep.subr.bf16.mxu0 %v557
      %683 = vmatpush2.bf16.msra.mxu0 %v556
      %684 = vmatprep.subr.bf16.mxu0 %v555
      %685 = vmatpush2.bf16.msra.mxu0 %v554
      %686 = vmatprep.subr.bf16.mxu0 %v553
      %687 = vmatpush2.bf16.msra.mxu0 %v552
      %688 = vmatprep.subr.bf16.mxu0 %v551
      %689 = vmatpush2.bf16.msra.mxu0 %v550
      %690 = vmatprep.subr.bf16.mxu0 %v549
      %691 = vmatpush2.bf16.msra.mxu0 %v548
      %692 = vmatprep.mubr.bf16.mxu0 %v273
      %693 = vmatmul.mubr.bf16.gmra.mxu0 %v272
      %v694 = vpop.f32.mrf.mxu0
      %v695 = vadd.f32 0.0, %v694
      %v696 = vpop.f32.mrf.mxu0
      %v697 = vadd.f32 0.0, %v696
      %v698 = vpop.f32.mrf.mxu0
      %v699 = vpop.f32.mrf.mxu0
      %700 = vdwg.mxu0
      %701 = vmatprep.subr.bf16.mxu0 %v579
      %702 = vmatpush1.bf16.msra.mxu0 %v578
      %703 = vmatprep.subr.bf16.mxu0 %v577
      %704 = vmatpush1.bf16.msra.mxu0 %v576
      %705 = vmatprep.subr.bf16.mxu0 %v575
      %706 = vmatpush1.bf16.msra.mxu0 %v574
      %707 = vmatprep.subr.bf16.mxu0 %v573
      %708 = vmatpush1.bf16.msra.mxu0 %v572
      %709 = vmatprep.subr.bf16.mxu0 %v571
      %710 = vmatpush1.bf16.msra.mxu0 %v570
      %711 = vmatprep.subr.bf16.mxu0 %v569
      %712 = vmatpush1.bf16.msra.mxu0 %v568
      %713 = vmatprep.subr.bf16.mxu0 %v567
      %714 = vmatpush1.bf16.msra.mxu0 %v566
      %715 = vmatprep.subr.bf16.mxu0 %v565
      %716 = vmatpush1.bf16.msra.mxu0 %v564
      %717 = vmatprep.subr.bf16.mxu0 %v595
      %718 = vmatpush2.bf16.msra.mxu0 %v594
      %719 = vmatprep.subr.bf16.mxu0 %v593
      %720 = vmatpush2.bf16.msra.mxu0 %v592
      %721 = vmatprep.subr.bf16.mxu0 %v591
      %722 = vmatpush2.bf16.msra.mxu0 %v590
      %723 = vmatprep.subr.bf16.mxu0 %v589
      %724 = vmatpush2.bf16.msra.mxu0 %v588
      %725 = vmatprep.subr.bf16.mxu0 %v587
      %726 = vmatpush2.bf16.msra.mxu0 %v586
      %727 = vmatprep.subr.bf16.mxu0 %v585
      %728 = vmatpush2.bf16.msra.mxu0 %v584
      %729 = vmatprep.subr.bf16.mxu0 %v583
      %730 = vmatpush2.bf16.msra.mxu0 %v582
      %731 = vmatprep.subr.bf16.mxu0 %v581
      %732 = vmatpush2.bf16.msra.mxu0 %v580
      %733 = vmatprep.mubr.bf16.mxu0 %v275
      %734 = vmatmul.mubr.bf16.gmra.mxu0 %v274
      %v735 = vpop.f32.mrf.mxu0
      %v736 = vadd.f32 %v695, %v735
      %v737 = vpop.f32.mrf.mxu0
      %v738 = vadd.f32 %v697, %v737
      %v739 = vpop.f32.mrf.mxu0
      %v740 = vpop.f32.mrf.mxu0
      %741 = vdwg.mxu0
      %v742 = vxor.u32 %v736, 2147483648
      %v743 = vxor.u32 %v738, 2147483648
      %v744 = vmul.f32 %v742, 1.442695
      %v745 = vpow.pop %v744
      %v746 = vmul.f32 %v743, 1.442695
      %v747 = vpow.pop %v746
      %v748 = vadd.f32 %v745, 1.0
      %v749 = vadd.f32 %v747, 1.0
      %v750 = vrcp.pop %v748
      %v751 = vmul.f32 1.0, %v750
      %v752 = vrcp.pop %v749
      %v753 = vmul.f32 1.0, %v752
      %v756 = vcombine.low %v751, %v753
      %v758 = vunpack.c.l.s4 1983009808
      %v759 = vunpack.c.0.s8 %v758
      %v760 = vlaneseq
      %v761 = vshrl.u32 %v760, 7
      %v762 = vsub.s32 %v759, %v761
      %v763 = vrot.slane %v756, %v762
      %765 = vst [vmem:[#allocation9] sm:$0xf] %v763
    $region29: #{tpu_custom_call.1} parent=1 // pred_fallthru
      _
    // Predicated region
    $region30: #{tpu_custom_call.1} parent=1 // pred_check
      _
    $region31: #{tpu_custom_call.1} parent=1 // pred_check_branch
      %767 = sbr.rel (0) target = $region33
    $region32: #{tpu_custom_call.1} parent=1 // pred_region
      %s769 = ssub.s32 64, 64
      %770 = vsyncadd [#allocation6], %s769
      %s772 = sshll.u32 [#allocation9], 4
      %s773 = int_to_ptr.vmem [resolvable:$true] %s772
      %775 = dma.vmem_to_hbm [thread:$0]  %s773, 64, %s2, [#allocation6]
    $region33: #{tpu_custom_call.1} parent=1 // pred_fallthru
      _
    // Predicated region
    $region34: #{tpu_custom_call.1} parent=1 // pred_check
      _
    $region35: #{tpu_custom_call.1} parent=1 // pred_check_branch
      %777 = sbr.rel (0) target = $region37
    $region36: #{tpu_custom_call.1} parent=1 // pred_region
      %778 = dma.done [#allocation6], 64
    $region37: #{tpu_custom_call.1} parent=1 // pred_fallthru
      _
    %779 = vsyncpa [#allocation5], 1
    %780 = vsyncpa [#allocation8], 1
    %781 = vsyncpa [#allocation6], 1

</llo_original>
